<compile_context>
chip_gen: v7x
topology: tpu7x:2x2x1
jax: 0.10.0
libtpu: 0.0.40
codegen_flags: <defaults>
</compile_context>

<pallas_src>
import functools

import jax
import jax.numpy as jnp
from jax import lax
from jax.experimental import pallas as pl
from jax.experimental.pallas import tpu as pltpu

MAX_EYE = 256


def _masked_contrastive_kernel(a_ref, b_ref, o_ref, logits_acc, pos_acc, *,
                               inv_temperature, dcl, a2b, b2a):
    k = pl.program_id(0)

    @pl.when(k == 0)
    def _init():
        logits_acc[...] = jnp.zeros_like(logits_acc)
        pos_acc[...] = jnp.zeros_like(pos_acc)

    # (B, tk) feature tiles in their native dtype (bf16 stays bf16 on the MXU).
    a = a_ref[...]
    b = b_ref[...]

    # logits += A_k @ B_k.T : transpose-free dot_general contracting the lane
    # (feature) dim of both operands, f32 accumulation on the MXU.
    logits_acc[...] += lax.dot_general(
        a, b,
        dimension_numbers=(((1,), (1,)), ((), ())),
        preferred_element_type=jnp.float32,
    )
    # Positive-pair (diagonal) logits via the trace identity:
    #   diag(A B^T)_i = sum_d A_id * B_id   -> (B, 1), no (B,B) eye mask needed.
    pos_acc[...] += jnp.sum(a.astype(jnp.float32) * b.astype(jnp.float32),
                            axis=1, keepdims=True)

    @pl.when(k == pl.num_programs(0) - 1)
    def _epilogue():
        inv_t = jnp.float32(inv_temperature)
        logits = logits_acc[...] * inv_t          # (B, B) f32
        pos = pos_acc[...] * inv_t                # (B, 1) f32
        bsz = logits.shape[0]
        mean_pos = jnp.sum(pos) * jnp.float32(1.0 / bsz)

        if dcl:
            # Decoupled contrastive learning: exclude the positive pair from the
            # denominators by masking the diagonal to -inf ONCE (exp -> 0 in both
            # the row and column sums).  Built only for dcl=True.
            row = lax.broadcasted_iota(jnp.int32, (bsz, bsz), 0)
            col = lax.broadcasted_iota(jnp.int32, (bsz, bsz), 1)
            logits = jnp.where(row == col, -jnp.inf, logits)

        loss = jnp.float32(0.0)
        n_terms = 0
        if a2b:
            # Per-ROW stable LSE: log(sum_j exp(l_ij)) = m_i + log(sum_j exp(l_ij - m_i)).
            m_row = jnp.max(logits, axis=1, keepdims=True)                 # (B, 1)
            s_row = jnp.sum(jnp.exp(logits - m_row), axis=1, keepdims=True)
            loss = loss + jnp.mean(jnp.log(s_row) + m_row)
            n_terms += 1
        if b2a:
            # Per-COLUMN stable LSE.
            m_col = jnp.max(logits, axis=0, keepdims=True)                 # (1, B)
            s_col = jnp.sum(jnp.exp(logits - m_col), axis=0, keepdims=True)
            loss = loss + jnp.mean(jnp.log(s_col) + m_col)
            n_terms += 1

        if n_terms == 2:
            loss = 0.5 * loss - mean_pos     # subtract mean_pos once, not twice
        else:
            loss = loss - mean_pos

        o_ref[0, 0] = loss


def masked_contrastive_loss(feat_a, feat_b, *, temperature=0.07, dcl=False,
                            a2b=True, b2a=True, block_k=512):
    """Pallas implementation of MaskedContrastiveLoss.forward (index=None, margin=0)."""
    assert feat_a.shape == feat_b.shape, (feat_a.shape, feat_b.shape)
    assert feat_a.dtype == feat_b.dtype, (feat_a.dtype, feat_b.dtype)
    assert feat_a.ndim == 2
    assert a2b or b2a, "Cannot set both `a2b` and `b2a` to False."
    bsz, dim = feat_a.shape
    assert bsz <= MAX_EYE
    assert not (dcl and bsz == 1), "dcl=True with batch size 1 gives log(0)."
    # TODO(synk): `index` labels, margin > 0 and temperature_trainable paths not
    # implemented (module defaults used).

    inv_temperature = 1.0 / float(temperature)

    # Contraction-axis tiling: one step for small D; block_k (multiple of 128)
    # steps for large D so feature DMA double-buffers behind the MXU.
    if dim > block_k and dim % block_k == 0:
        tk = block_k
    else:
        tk = dim
    grid = (dim // tk,)

    kernel = functools.partial(
        _masked_contrastive_kernel,
        inv_temperature=inv_temperature, dcl=dcl, a2b=a2b, b2a=b2a,
    )

    itemsize = jnp.dtype(feat_a.dtype).itemsize
    cost = pl.CostEstimate(
        flops=2 * bsz * bsz * dim,
        transcendentals=2 * bsz * bsz + 2 * bsz,
        bytes_accessed=2 * bsz * dim * itemsize + 4,
    )

    out = pl.pallas_call(
        kernel,
        out_shape=jax.ShapeDtypeStruct((1, 1), jnp.float32),
        grid_spec=pltpu.PrefetchScalarGridSpec(
            num_scalar_prefetch=0,
            grid=grid,
            in_specs=[
                pl.BlockSpec((bsz, tk), lambda k: (0, k)),
                pl.BlockSpec((bsz, tk), lambda k: (0, k)),
            ],
            out_specs=pl.BlockSpec(memory_space=pltpu.SMEM),
            scratch_shapes=[
                pltpu.VMEM((bsz, bsz), jnp.float32),   # logits accumulator
                pltpu.VMEM((bsz, 1), jnp.float32),     # positive (diagonal) logits
            ],
        ),
        compiler_params=pltpu.CompilerParams(
            dimension_semantics=("arbitrary",),
        ),
        cost_estimate=cost,
    )(feat_a, feat_b)
    return out[0, 0]


def _reference_loss(feat_a, feat_b, *, temperature=0.07, dcl=False,
                    a2b=True, b2a=True):
    # Pure-JAX mirror of the PyTorch forward (index=None, margin=0).
    inv_t = 1.0 / temperature
    a = feat_a.astype(jnp.float32)
    b = feat_b.astype(jnp.float32)
    bsz = a.shape[0]
    logits = a @ b.T * inv_t
    pos = jnp.diag(logits)
    if dcl:
        neg_mask = 1.0 - jnp.eye(bsz, dtype=jnp.float32)
    else:
        neg_mask = jnp.ones((bsz, bsz), jnp.float32)
    exp_logits = jnp.exp(logits) * neg_mask
    loss = 0.0
    n = 0
    if a2b:
        loss = loss + jnp.mean(-pos + jnp.log(jnp.sum(exp_logits, axis=1)))
        n += 1
    if b2a:
        loss = loss + jnp.mean(-pos + jnp.log(jnp.sum(exp_logits, axis=0)))
        n += 1
    return loss / 2.0 if n == 2 else loss


if __name__ == "__main__":
    key = jax.random.PRNGKey(0)
    ka, kb = jax.random.split(key)
    B, D = 8, 32  # small paired-feature batch from two modalities

    # CLIP-style L2-normalized features: keeps the *unstabilized* reference
    # finite at temperature=0.07 so it can be compared against directly.
    fa32 = jax.random.normal(ka, (B, D), dtype=jnp.float32)
    fb32 = jax.random.normal(kb, (B, D), dtype=jnp.float32)
    fa32 = fa32 / jnp.linalg.norm(fa32, axis=-1, keepdims=True)
    fb32 = fb32 / jnp.linalg.norm(fb32, axis=-1, keepdims=True)

    # Preferred (perf) path: bf16 features straight into the MXU.
    fa_bf = fa32.astype(jnp.bfloat16)
    fb_bf = fb32.astype(jnp.bfloat16)
    loss_bf = jax.block_until_ready(masked_contrastive_loss(fa_bf, fb_bf))
    ref_bf = _reference_loss(fa_bf, fb_bf)
    assert jnp.isfinite(loss_bf)
    assert jnp.allclose(loss_bf, ref_bf, rtol=2e-2, atol=2e-2), (loss_bf, ref_bf)

    # f32 path matches tightly.
    loss_f32 = jax.block_until_ready(masked_contrastive_loss(fa32, fb32))
    ref_f32 = _reference_loss(fa32, fb32)
    assert jnp.allclose(loss_f32, ref_f32, rtol=1e-4, atol=1e-4), (loss_f32, ref_f32)

    # Decoupled-contrastive-learning branch.
    loss_dcl = jax.block_until_ready(masked_contrastive_loss(fa32, fb32, dcl=True))
    ref_dcl = _reference_loss(fa32, fb32, dcl=True)
    assert jnp.allclose(loss_dcl, ref_dcl, rtol=1e-4, atol=1e-4), (loss_dcl, ref_dcl)

    print("KERNEL_OK")
</pallas_src>

<mosaic_0001>
module attributes {stable_mosaic.version = 11 : i64} {
  func.func @_masked_contrastive_kernel(%arg0: i32, %arg1: memref<8x32xbf16, #tpu.memory_space<vmem>>, %arg2: memref<8x32xbf16, #tpu.memory_space<vmem>>, %arg3: memref<1x1xf32, #tpu.memory_space<smem>>, %arg4: memref<8x8xf32, #tpu.memory_space<vmem>>, %arg5: memref<8x1xf32, #tpu.memory_space<vmem>>) attributes {dimension_semantics = [#tpu.dimension_semantics<arbitrary>], iteration_bounds = array<i64: 1>, scalar_prefetch = 0 : i64, scratch_operands = 2 : i64, tpu.core_type = #tpu.core_type<tc>, window_params = [{transform_indices = @transform_0, window_bounds = array<i64: 8, 32>}, {transform_indices = @transform_1, window_bounds = array<i64: 8, 32>}, {transform_indices = @transform_2, window_bounds = array<i64: 1, 1>}]} {
    %c0_i32 = arith.constant 0 : i32
    %0 = arith.cmpi eq, %arg0, %c0_i32 : i32
    %1 = arith.extui %0 : i1 to i32
    %c0_i32_0 = arith.constant 0 : i32
    %2 = arith.cmpi ne, %1, %c0_i32_0 : i32
    scf.if %2 {
      %cst_15 = arith.constant 0.000000e+00 : f32
      %20 = vector.broadcast %cst_15 : f32 to vector<8x8xf32>
      %c0_16 = arith.constant 0 : index
      %c0_17 = arith.constant 0 : index
      %21 = vector.load %arg4[%c0_16, %c0_17] : memref<8x8xf32, #tpu.memory_space<vmem>>, vector<8x8xf32>
      tpu.vector_store %arg4[%c0_16, %c0_17], %20 {strides = array<i32>} : memref<8x8xf32, #tpu.memory_space<vmem>>, vector<8x8xf32>,
      %cst_18 = arith.constant 0.000000e+00 : f32
      %22 = vector.broadcast %cst_18 : f32 to vector<8x1xf32>
      %c0_19 = arith.constant 0 : index
      %c0_20 = arith.constant 0 : index
      %23 = vector.load %arg5[%c0_19, %c0_20] : memref<8x1xf32, #tpu.memory_space<vmem>>, vector<8x1xf32>
      tpu.vector_store %arg5[%c0_19, %c0_20], %22 {strides = array<i32>} : memref<8x1xf32, #tpu.memory_space<vmem>>, vector<8x1xf32>,
    } else {
    }
    %c0 = arith.constant 0 : index
    %c0_1 = arith.constant 0 : index
    %3 = vector.load %arg1[%c0, %c0_1] : memref<8x32xbf16, #tpu.memory_space<vmem>>, vector<8x32xbf16>
    %c0_2 = arith.constant 0 : index
    %c0_3 = arith.constant 0 : index
    %4 = vector.load %arg2[%c0_2, %c0_3] : memref<8x32xbf16, #tpu.memory_space<vmem>>, vector<8x32xbf16>
    %c0_4 = arith.constant 0 : index
    %c0_5 = arith.constant 0 : index
    %5 = vector.load %arg4[%c0_4, %c0_5] : memref<8x8xf32, #tpu.memory_space<vmem>>, vector<8x8xf32>
    %cst = arith.constant dense<0.000000e+00> : vector<8x8xf32>
    %6 = tpu.matmul %3, %4, %cst {dimension_numbers = #tpu.dot_dimension_numbers<[1], [1], [0], [0], [0, 0, 1, 0], [], []>} : vector<8x32xbf16>, vector<8x32xbf16>, vector<8x8xf32> -> vector<8x8xf32>
    %7 = arith.addf %5, %6 : vector<8x8xf32>
    %c0_6 = arith.constant 0 : index
    %c0_7 = arith.constant 0 : index
    %8 = vector.load %arg4[%c0_6, %c0_7] : memref<8x8xf32, #tpu.memory_space<vmem>>, vector<8x8xf32>
    tpu.vector_store %arg4[%c0_6, %c0_7], %7 {strides = array<i32>} : memref<8x8xf32, #tpu.memory_space<vmem>>, vector<8x8xf32>,
    %c0_8 = arith.constant 0 : index
    %c0_9 = arith.constant 0 : index
    %9 = vector.load %arg5[%c0_8, %c0_9] : memref<8x1xf32, #tpu.memory_space<vmem>>, vector<8x1xf32>
    %10 = arith.extf %3 : vector<8x32xbf16> to vector<8x32xf32>
    %11 = arith.extf %4 : vector<8x32xbf16> to vector<8x32xf32>
    %12 = arith.mulf %10, %11 : vector<8x32xf32>
    %cst_10 = arith.constant dense<0.000000e+00> : vector<8xf32>
    %13 = vector.multi_reduction <add>, %12, %cst_10 [1] : vector<8x32xf32> to vector<8xf32>
    %14 = vector.shape_cast %13 : vector<8xf32> to vector<8x1xf32>
    %15 = arith.addf %9, %14 : vector<8x1xf32>
    %c0_11 = arith.constant 0 : index
    %c0_12 = arith.constant 0 : index
    %16 = vector.load %arg5[%c0_11, %c0_12] : memref<8x1xf32, #tpu.memory_space<vmem>>, vector<8x1xf32>
    tpu.vector_store %arg5[%c0_11, %c0_12], %15 {strides = array<i32>} : memref<8x1xf32, #tpu.memory_space<vmem>>, vector<8x1xf32>,
    %c0_i32_13 = arith.constant 0 : i32
    %17 = arith.cmpi eq, %arg0, %c0_i32_13 : i32
    %18 = arith.extui %17 : i1 to i32
    %c0_i32_14 = arith.constant 0 : i32
    %19 = arith.cmpi ne, %18, %c0_i32_14 : i32
    scf.if %19 {
      %c0_15 = arith.constant 0 : index
      %c0_16 = arith.constant 0 : index
      %20 = vector.load %arg4[%c0_15, %c0_16] : memref<8x8xf32, #tpu.memory_space<vmem>>, vector<8x8xf32>
      %cst_17 = arith.constant 14.2857141 : f32
      %21 = vector.broadcast %cst_17 : f32 to vector<8x8xf32>
      %22 = arith.mulf %20, %21 : vector<8x8xf32>
      %c0_18 = arith.constant 0 : index
      %c0_19 = arith.constant 0 : index
      %23 = vector.load %arg5[%c0_18, %c0_19] : memref<8x1xf32, #tpu.memory_space<vmem>>, vector<8x1xf32>
      %cst_20 = arith.constant 14.2857141 : f32
      %24 = vector.broadcast %cst_20 : f32 to vector<8x1xf32>
      %25 = arith.mulf %23, %24 : vector<8x1xf32>
      %26 = vector.shape_cast %25 : vector<8x1xf32> to vector<1x8x1xf32>
      %cst_21 = arith.constant dense<0.000000e+00> : vector<1xf32>
      %27 = vector.multi_reduction <add>, %26, %cst_21 [1, 2] : vector<1x8x1xf32> to vector<1xf32>
      %28 = vector.shape_cast %27 : vector<1xf32> to vector<1x1x1xf32>
      %29 = vector.extract %28[0, 0, 0] : f32 from vector<1x1x1xf32>
      %cst_22 = arith.constant 1.250000e-01 : f32
      %30 = arith.mulf %29, %cst_22 : f32
      %cst_23 = arith.constant dense<0xFF800000> : vector<8xf32>
      %31 = vector.multi_reduction <maximumf>, %22, %cst_23 [1] : vector<8x8xf32> to vector<8xf32>
      %32 = vector.shape_cast %31 : vector<8xf32> to vector<8x1xf32>
      %33 = vector.broadcast %32 : vector<8x1xf32> to vector<8x8xf32>
      %34 = arith.subf %22, %33 : vector<8x8xf32>
      %35 = math.exp %34 : vector<8x8xf32>
      %cst_24 = arith.constant dense<0.000000e+00> : vector<8xf32>
      %36 = vector.multi_reduction <add>, %35, %cst_24 [1] : vector<8x8xf32> to vector<8xf32>
      %37 = vector.shape_cast %36 : vector<8xf32> to vector<8x1xf32>
      %38 = math.log %37 : vector<8x1xf32>
      %39 = arith.addf %38, %32 : vector<8x1xf32>
      %40 = vector.shape_cast %39 : vector<8x1xf32> to vector<1x8x1xf32>
      %cst_25 = arith.constant dense<0.000000e+00> : vector<1xf32>
      %41 = vector.multi_reduction <add>, %40, %cst_25 [1, 2] : vector<1x8x1xf32> to vector<1xf32>
      %42 = vector.shape_cast %41 : vector<1xf32> to vector<1x1x1xf32>
      %43 = vector.extract %42[0, 0, 0] : f32 from vector<1x1x1xf32>
      %cst_26 = arith.constant 8.000000e+00 : f32
      %44 = arith.divf %43, %cst_26 : f32
      %cst_27 = arith.constant 0.000000e+00 : f32
      %45 = arith.addf %cst_27, %44 : f32
      %cst_28 = arith.constant dense<0xFF800000> : vector<8xf32>
      %46 = vector.multi_reduction <maximumf>, %22, %cst_28 [0] : vector<8x8xf32> to vector<8xf32>
      %47 = vector.shape_cast %46 : vector<8xf32> to vector<1x8xf32>
      %48 = vector.broadcast %47 : vector<1x8xf32> to vector<8x8xf32>
      %49 = arith.subf %22, %48 : vector<8x8xf32>
      %50 = math.exp %49 : vector<8x8xf32>
      %cst_29 = arith.constant dense<0.000000e+00> : vector<8xf32>
      %51 = vector.multi_reduction <add>, %50, %cst_29 [0] : vector<8x8xf32> to vector<8xf32>
      %52 = vector.shape_cast %51 : vector<8xf32> to vector<1x8xf32>
      %53 = math.log %52 : vector<1x8xf32>
      %54 = arith.addf %53, %47 : vector<1x8xf32>
      %55 = vector.shape_cast %54 : vector<1x8xf32> to vector<1x1x8xf32>
      %cst_30 = arith.constant dense<0.000000e+00> : vector<1xf32>
      %56 = vector.multi_reduction <add>, %55, %cst_30 [1, 2] : vector<1x1x8xf32> to vector<1xf32>
      %57 = vector.shape_cast %56 : vector<1xf32> to vector<1x1x1xf32>
      %58 = vector.extract %57[0, 0, 0] : f32 from vector<1x1x1xf32>
      %cst_31 = arith.constant 8.000000e+00 : f32
      %59 = arith.divf %58, %cst_31 : f32
      %60 = arith.addf %45, %59 : f32
      %cst_32 = arith.constant 5.000000e-01 : f32
      %61 = arith.mulf %cst_32, %60 : f32
      %62 = arith.subf %61, %30 : f32
      %c0_33 = arith.constant 0 : index
      %c0_34 = arith.constant 0 : index
      %63 = memref.load %arg3[%c0_33, %c0_34] : memref<1x1xf32, #tpu.memory_space<smem>>
      memref.store %62, %arg3[%c0_33, %c0_34] : memref<1x1xf32, #tpu.memory_space<smem>>
    } else {
    }
    return
  }
  func.func @transform_0(%arg0: i32) -> (i32, i32) {
    %c0_i32 = arith.constant 0 : i32
    %c0_i32_0 = arith.constant 0 : i32
    return %c0_i32, %arg0 : i32, i32
  }
  func.func @transform_1(%arg0: i32) -> (i32, i32) {
    %c0_i32 = arith.constant 0 : i32
    %c0_i32_0 = arith.constant 0 : i32
    return %c0_i32, %arg0 : i32, i32
  }
  func.func @transform_2(%arg0: i32) -> (i32, i32) {
    %c0_i32 = arith.constant 0 : i32
    %c0_i32_0 = arith.constant 0 : i32
    %c0_i32_1 = arith.constant 0 : i32
    return %c0_i32, %c0_i32_0 : i32, i32
  }
}

</mosaic_0001>

<llo_original>
// kernel: tpu_custom_call.1
$region0: #{tpu_custom_call.1}
  #allocation0 [shape = 'u32[]', space=smem, size = 0x4, offset = 0x4, fixed_abs, tag = 'smem constant byte address 0x4 - core index']
  #allocation1 [shape = 'u32[144,128]{1,0:T(1,128)}', space=vmem, size = 0x12000, scoped, tag = 'internal scratch']
  #allocation2 [shape = 'f32[8,8]{1,0:T(8,128)}', space=vmem, size = 0x1000, scoped, tag = 'scratch operand']
  #allocation3 [shape = 'f32[8,1]{1,0:T(8,128)}', space=vmem, size = 0x1000, scoped, tag = 'scratch operand']
  %s0 = inlined_call_operand.hbm [shape: bf16[8,32], index: 0, kind: input, shape index: {}]
  %s1 = inlined_call_operand.hbm [shape: bf16[8,32], index: 1, kind: input, shape index: {}]
  %s2 = inlined_call_operand.hbm [shape: f32[1,1], index: 2, kind: output, shape index: {}]
  %s3 = sld [smem:[#allocation0]]
  $region34: #{tpu_custom_call.1} parent=0
    _
  %s5 = ssub.s32 1, %s3
  %s6 = scalar_select 0, %s5, %s3
  $region1: #{tpu_custom_call.1} parent=0
    #allocation4 [shape = 'u8[2048]{0}', space=vmem, size = 0x800, scoped, tag = 'input window, operand 0, single buffered']
    #allocation5 [shape = 's32[1]{0}', space=sflag, size = 0x4, scoped, tag = 'scoped memory for tpu_custom_call.1']
    #allocation6 [shape = 's32[1]{0}', space=sflag, size = 0x4, scoped, tag = 'scoped memory for tpu_custom_call.1']
    #allocation7 [shape = 'u8[2048]{0}', space=vmem, size = 0x800, scoped, tag = 'input window, operand 1, single buffered']
    #allocation8 [shape = 's32[1]{0}', space=sflag, size = 0x4, scoped, tag = 'scoped memory for tpu_custom_call.1']
    #allocation9 [shape = 'u8[512]{0}', space=smem, size = 0x200, scoped, tag = 'output window, operand 0, single buffered']
    %7 = vsyncpa [#allocation5], 0
    %8 = vsyncpa [#allocation8], 0
    %9 = vsyncpa [#allocation6], 0
    // Predicated region
    $region2: #{tpu_custom_call.1} parent=1 // pred_check
      _
    $region3: #{tpu_custom_call.1} parent=1 // pred_check_branch
      %11 = sbr.rel (0) target = $region5
    $region4: #{tpu_custom_call.1} parent=1 // pred_region
      %s13 = ssub.s32 64, 64
      %14 = vsyncadd [#allocation5], %s13
      %s16 = sshll.u32 [#allocation4], 4
      %s17 = int_to_ptr.vmem [resolvable:$true] %s16
      %19 = dma.hbm_to_vmem [thread:$0]  %s0, 64, %s17, [#allocation5]
    $region5: #{tpu_custom_call.1} parent=1 // pred_fallthru
      _
    // Predicated region
    $region6: #{tpu_custom_call.1} parent=1 // pred_check
      _
    $region7: #{tpu_custom_call.1} parent=1 // pred_check_branch
      %21 = sbr.rel (0) target = $region9
    $region8: #{tpu_custom_call.1} parent=1 // pred_region
      %s23 = ssub.s32 64, 64
      %24 = vsyncadd [#allocation8], %s23
      %s26 = sshll.u32 [#allocation7], 4
      %s27 = int_to_ptr.vmem [resolvable:$true] %s26
      %29 = dma.hbm_to_vmem [thread:$0]  %s1, 64, %s27, [#allocation8]
    $region9: #{tpu_custom_call.1} parent=1 // pred_fallthru
      _
    // Predicated region
    $region10: #{tpu_custom_call.1} parent=1 // pred_check
      _
    $region11: #{tpu_custom_call.1} parent=1 // pred_check_branch
      %31 = sbr.rel (0) target = $region13
    $region12: #{tpu_custom_call.1} parent=1 // pred_region
      %32 = dma.done [#allocation5], 64
    $region13: #{tpu_custom_call.1} parent=1 // pred_fallthru
      _
    // Predicated region
    $region14: #{tpu_custom_call.1} parent=1 // pred_check
      _
    $region15: #{tpu_custom_call.1} parent=1 // pred_check_branch
      %34 = sbr.rel (0) target = $region17
    $region16: #{tpu_custom_call.1} parent=1 // pred_region
      %35 = dma.done [#allocation8], 64
    $region17: #{tpu_custom_call.1} parent=1 // pred_fallthru
      _
    %p37 = scmp.eq.s32.totalorder 0, 0
    // Predicated region
    $region18: #{tpu_custom_call.1} parent=1 // pred_check
      %p38 = pneg %p37
    $region19: #{tpu_custom_call.1} parent=1 // pred_check_branch
      %40 = sbr.rel (%p38) target = $region21
    $region20: #{tpu_custom_call.1} parent=1 // pred_region
      %vm41 = vcmask 64512
      %42 = vst.msk [vmem:[#allocation2] sm:$0xff] %vm41, 0.0
      %vm43 = vcmask 7168
      %44 = vst.msk [vmem:[#allocation3] sm:$0xff] %vm43, 0.0
    $region21: #{tpu_custom_call.1} parent=1 // pred_fallthru
      _
    %v45 = vld [vmem:[#allocation4] sm:$0xf]
    %v46 = vld [vmem:[#allocation7] sm:$0xf]
    %v47 = vld [vmem:[#allocation2] sm:$0xff]
    %vm48 = vcmask 261120
    %v50 = vsel %vm48, %v45, 0
    %v53 = vsel %vm48, %v46, 0
    %55 = vmatprep.subr.bf16.mxu0 0
    %56 = vmatpush1.bf16.xpose.msra.mxu0 %v53
    %57 = vmatprep.subr.bf16.mxu0 0
    %58 = vmatpush1.bf16.xpose.msra.mxu0 0
    %59 = vmatprep.subr.bf16.mxu0 0
    %60 = vmatpush1.bf16.xpose.msra.mxu0 0
    %61 = vmatprep.subr.bf16.mxu0 0
    %62 = vmatpush1.bf16.xpose.msra.mxu0 0
    %63 = vmatprep.subr.bf16.mxu0 0
    %64 = vmatpush1.bf16.xpose.msra.mxu0 0
    %65 = vmatprep.subr.bf16.mxu0 0
    %66 = vmatpush1.bf16.xpose.msra.mxu0 0
    %67 = vmatprep.subr.bf16.mxu0 0
    %68 = vmatpush1.bf16.xpose.msra.mxu0 0
    %69 = vmatprep.subr.bf16.mxu0 0
    %70 = vmatpush1.bf16.xpose.msra.mxu0 0
    %71 = vmatprep.subr.bf16.mxu0 0
    %72 = vmatpush1.bf16.xpose.msra.mxu0 0
    %73 = vmatprep.subr.bf16.mxu0 0
    %74 = vmatpush1.bf16.xpose.msra.mxu0 0
    %75 = vmatprep.subr.bf16.mxu0 0
    %76 = vmatpush1.bf16.xpose.msra.mxu0 0
    %77 = vmatprep.subr.bf16.mxu0 0
    %78 = vmatpush1.bf16.xpose.msra.mxu0 0
    %79 = vmatprep.subr.bf16.mxu0 0
    %80 = vmatpush1.bf16.xpose.msra.mxu0 0
    %81 = vmatprep.subr.bf16.mxu0 0
    %82 = vmatpush1.bf16.xpose.msra.mxu0 0
    %83 = vmatprep.subr.bf16.mxu0 0
    %84 = vmatpush1.bf16.xpose.msra.mxu0 0
    %85 = vmatprep.subr.bf16.mxu0 0
    %86 = vmatpush1.bf16.xpose.msra.mxu0 0
    %87 = vmatprep.mubr.bf16.mxu0 0
    %88 = vmatmul.mubr.bf16.gmra.mrb[0].mxu0 %v50
    %v89 = vpop.f32.mrb[0].mxu0
    %v90 = vadd.f32 0.0, %v89
    %v91 = vpop.f32.mrb[0].mxu0
    %v92 = vpop.f32.mrb[0].mxu0
    %v93 = vpop.f32.mrb[0].mxu0
    %94 = vdwg.mxu0
    %v95 = vadd.f32 %v47, %v90
    %vm96 = vcmask 64512
    %97 = vst.msk [vmem:[#allocation2] sm:$0xff] %vm96, %v95
    %v98 = vld [vmem:[#allocation3] sm:$0xff]
    %v99 = vunpack.c.l.bf16 %v45
    %v100 = vunpack.c.l.bf16 %v46
    %v101 = vmul.f32 %v99, %v100
    %v102 = vsel %vm48, %v101, 0.0
    %103 = vadd.xlane.f32.xlu0 %v102
    %v104 = vpop.xlane.xlu0 %103
    %v105 = vadd.f32 %v98, %v104
    %vm106 = vcmask 7168
    %107 = vst.msk [vmem:[#allocation3] sm:$0xff] %vm106, %v105
    // Predicated region
    $region22: #{tpu_custom_call.1} parent=1 // pred_check
      %p108 = pneg %p37
    $region23: #{tpu_custom_call.1} parent=1 // pred_check_branch
      %110 = sbr.rel (%p108) target = $region25
    $region24: #{tpu_custom_call.1} parent=1 // pred_region
      %v111 = vld [vmem:[#allocation2] sm:$0xff]
      %v112 = vmul.f32 %v111, 14.285714
      %v113 = vld [vmem:[#allocation3] sm:$0xff]
      %v114 = vmul.f32 %v113, 14.285714
      %v115 = vsel %vm106, %v114, 0.0
      %116 = vadd.xlane.f32.xlu0 %v115
      %v117 = vpop.xlane.xlu0 %116
      %v118 = vrot.slane %v117, 4
      %v119 = vadd.f32 %v117, %v118
      %v120 = vrot.slane %v119, 2
      %v121 = vadd.f32 %v119, %v120
      %v122 = vrot.slane %v121, 1
      %v123 = vadd.f32 %v121, %v122
      %s124 = vtos %v123
      %s125 = smul.f32 %s124, 0.125
      %v126 = vsel %vm96, %v112, -inf
      %127 = vmax.xlane.f32.xlu0 %v126
      %v128 = vpop.xlane.xlu0 %127
      %v129 = vsub.f32 %v112, %v128
      %v130 = vmul.f32 %v129, 1.442695
      %v131 = vpow.pop %v130
      %v132 = vsel %vm96, %v131, 0.0
      %133 = vadd.xlane.f32.xlu0 %v132
      %v134 = vpop.xlane.xlu0 %133
      %v135 = vlog2.pop %v134
      %v136 = vmul.f32 %v135, 0.6931472
      %v137 = vadd.f32 %v136, %v128
      %v138 = vsel %vm106, %v137, 0.0
      %139 = vadd.xlane.f32.xlu0 %v138
      %v140 = vpop.xlane.xlu0 %139
      %v141 = vrot.slane %v140, 4
      %v142 = vadd.f32 %v140, %v141
      %v143 = vrot.slane %v142, 2
      %v144 = vadd.f32 %v142, %v143
      %v145 = vrot.slane %v144, 1
      %v146 = vadd.f32 %v144, %v145
      %s147 = vtos %v146
      %v148 = vrcp.pop 8.0
      %s149 = vtos %v148
      %s150 = smul.f32 %s147, %s149
      %s151 = sadd.f32 %s150, 0.0
      %v152 = vrot.slane %v126, 4
      %v153 = vmax.f32 %v126, %v152
      %v154 = vrot.slane %v153, 2
      %v155 = vmax.f32 %v153, %v154
      %v156 = vrot.slane %v155, 1
      %v157 = vmax.f32 %v155, %v156
      %v158 = vsub.f32 %v112, %v157
      %v159 = vmul.f32 %v158, 1.442695
      %v160 = vpow.pop %v159
      %v161 = vsel %vm96, %v160, 0.0
      %v162 = vrot.slane %v161, 4
      %v163 = vadd.f32 %v161, %v162
      %v164 = vrot.slane %v163, 2
      %v165 = vadd.f32 %v163, %v164
      %v166 = vrot.slane %v165, 1
      %v167 = vadd.f32 %v165, %v166
      %v168 = vlog2.pop %v167
      %v169 = vmul.f32 %v168, 0.6931472
      %v170 = vadd.f32 %v169, %v157
      %vm171 = vcmask 57344
      %v172 = vsel %vm171, %v170, 0.0
      %173 = vadd.xlane.f32.xlu0 %v172
      %v174 = vpop.xlane.xlu0 %173
      %v175 = vrot.slane %v174, 4
      %v176 = vadd.f32 %v174, %v175
      %v177 = vrot.slane %v176, 2
      %v178 = vadd.f32 %v176, %v177
      %v179 = vrot.slane %v178, 1
      %v180 = vadd.f32 %v178, %v179
      %s181 = vtos %v180
      %v182 = vrcp.pop 8.0
      %s183 = vtos %v182
      %s184 = smul.f32 %s181, %s183
      %s185 = sadd.f32 %s151, %s184
      %s186 = smul.f32 %s185, 0.5
      %s187 = ssub.f32 %s186, %s125
      %s188 = scalar_lea.smem [#allocation9], 0
      %189 = sst [smem:[%s188]] %s187
    $region25: #{tpu_custom_call.1} parent=1 // pred_fallthru
      _
    // Predicated region
    $region26: #{tpu_custom_call.1} parent=1 // pred_check
      _
    $region27: #{tpu_custom_call.1} parent=1 // pred_check_branch
      %191 = sbr.rel (0) target = $region29
    $region28: #{tpu_custom_call.1} parent=1 // pred_region
      %s193 = ssub.s32 16, 16
      %194 = vsyncadd [#allocation6], %s193
      %197 = dma.smem_to_hbm [#allocation9], 16, %s2, [#allocation6]
    $region29: #{tpu_custom_call.1} parent=1 // pred_fallthru
      _
    // Predicated region
    $region30: #{tpu_custom_call.1} parent=1 // pred_check
      _
    $region31: #{tpu_custom_call.1} parent=1 // pred_check_branch
      %199 = sbr.rel (0) target = $region33
    $region32: #{tpu_custom_call.1} parent=1 // pred_region
      %200 = dma.done [#allocation6], 16
    $region33: #{tpu_custom_call.1} parent=1 // pred_fallthru
      _
    %201 = sfence
    %202 = vsyncpa [#allocation5], 1
    %203 = vsyncpa [#allocation8], 1
    %204 = vsyncpa [#allocation6], 1

</llo_original>
